<compile_context>
chip_gen: v6e
topology: v6e:2x2x1
jax: 0.10.0
libtpu: 0.0.40
codegen_flags: <defaults>
</compile_context>

<pallas_src>
import functools

import jax
import jax.numpy as jnp
from jax.experimental import pallas as pl
from jax.experimental.pallas import tpu as pltpu


def _round_up(v, m):
    return (v + m - 1) // m * m


def _pick_vmem_limit_bytes():
    """~100 MiB on v5e/v6e (128 MiB physical), ~48 MiB on v7x (64 MiB physical).

    Falls back to a conservative 48 MiB when the hardware query is unavailable
    (e.g. interpret mode / no local TPU).
    """
    try:
        cap = pltpu.get_tpu_info().vmem_capacity_bytes
    except Exception:  # pragma: no cover - interpret mode / query unavailable
        cap = 64 << 20
    return max(32 << 20, min(cap - (16 << 20), 100 << 20))


def _mlp_kernel(x_ref, w1_ref, b1_ref, w2_ref, b2_ref, w3_ref, b3_ref, o_ref):
    # Downcast the streamed activation tile in-kernel (no separate host-side
    # pad/cast XLA op and its extra HBM round trip).
    x = x_ref[...].astype(w1_ref.dtype)
    # Layer 1: x @ w1 + b1, ReLU. bf16 MXU inputs, f32 accumulation.
    h1 = jnp.dot(x, w1_ref[...], preferred_element_type=jnp.float32)
    h1 = jnp.maximum(h1 + b1_ref[...], 0.0)
    # Layer 2: h1 @ w2 + b2, ReLU.
    h2 = jnp.dot(h1.astype(w2_ref.dtype), w2_ref[...],
                 preferred_element_type=jnp.float32)
    h2 = jnp.maximum(h2 + b2_ref[...], 0.0)
    # Output layer: h2 @ w3 + b3, sigmoid.
    z = jnp.dot(h2.astype(w3_ref.dtype), w3_ref[...],
                preferred_element_type=jnp.float32)
    z = z + b3_ref[...]
    # sigmoid(z) = 1 / (1 + exp(-z)); exp and reciprocal both run on the EUP.
    o_ref[...] = pl.reciprocal(1.0 + jnp.exp(-z), approx=True).astype(o_ref.dtype)


def init_params(key, n_features, n_neurons, n_out):
    """Mimics nn.Linear init U(-1/sqrt(fan_in), 1/sqrt(fan_in)).

    Weights are stored already transposed to (in, out); biases as (1, out).
    """
    ks = jax.random.split(key, 6)

    def linear(kw, kb, fan_in, fan_out):
        bound = 1.0 / jnp.sqrt(jnp.float32(fan_in))
        w = jax.random.uniform(kw, (fan_in, fan_out), jnp.float32, -bound, bound)
        b = jax.random.uniform(kb, (1, fan_out), jnp.float32, -bound, bound)
        return w, b

    w1, b1 = linear(ks[0], ks[1], n_features, n_neurons)
    w2, b2 = linear(ks[2], ks[3], n_neurons, n_neurons)
    w3, b3 = linear(ks[4], ks[5], n_neurons, n_out)
    return {"w1": w1, "b1": b1, "w2": w2, "b2": b2, "w3": w3, "b3": b3}


def prepare_params(params, *, compute_dtype=jnp.bfloat16):
    """Zero-pad all feature dims to lane multiples of 128 and cast weights to
    the matmul compute dtype. Biases stay float32. Returns arrays only (so the
    pytree carries no Python ints into jit)."""
    n_features, n_neurons = params["w1"].shape
    n_out = params["w3"].shape[1]
    kp = _round_up(n_features, 128)
    np_ = _round_up(n_neurons, 128)
    op = _round_up(n_out, 128)

    def pad2(a, rows, cols):
        return jnp.pad(a, ((0, rows - a.shape[0]), (0, cols - a.shape[1])))

    return {
        "w1": pad2(params["w1"], kp, np_).astype(compute_dtype),
        "b1": pad2(params["b1"], 1, np_).astype(jnp.float32),
        "w2": pad2(params["w2"], np_, np_).astype(compute_dtype),
        "b2": pad2(params["b2"], 1, np_).astype(jnp.float32),
        "w3": pad2(params["w3"], np_, op).astype(compute_dtype),
        "b3": pad2(params["b3"], 1, op).astype(jnp.float32),
    }


def _resident_spec(shape):
    """BlockSpec for a grid-invariant (weight/bias) operand.

    Constant index_map => the block never changes across the grid, so single
    buffering (pl.Buffered(1)) halves its VMEM footprint with zero perf cost.
    """
    return pl.BlockSpec(shape, lambda i: (0,) * len(shape),
                        pipeline_mode=pl.Buffered(1))


@functools.partial(jax.jit, static_argnames=("n_out", "batch_tile", "out_dtype"))
def two_layer_model_forward(x, padded_params, *, n_out, batch_tile=256,
                            out_dtype=jnp.float32):
    """x: [B, n_features] float32 (or bf16). padded_params: prepare_params()."""
    B, n_features = x.shape
    w1, b1 = padded_params["w1"], padded_params["b1"]
    w2, b2 = padded_params["w2"], padded_params["b2"]
    w3, b3 = padded_params["w3"], padded_params["b3"]

    kp = w1.shape[0]          # padded n_features
    np_ = w1.shape[1]         # padded n_neurons
    op = w3.shape[1]          # padded n_out

    # --- batch tiling ------------------------------------------------------
    # Round to 16 rows (bf16 packed-sublane height). Never collapse to a
    # single grid step for non-trivial batches: >=2 tiles lets the BlockSpec
    # pipeline overlap x/out DMA with the MXU and lets v7x shard the
    # "parallel" axis across its 2 TensorCores. Large batches use 256-row
    # tiles (multiple of 256 for MXU M-streaming).
    bp = _round_up(B, 16)
    if bp <= 32:
        tm = bp                                   # too small to split
    elif bp <= 2 * batch_tile:
        tm = _round_up(-(-bp // 2), 16)           # exactly 2 tiles
    else:
        tm = batch_tile
    bp = _round_up(bp, tm)
    grid = (bp // tm,)

    # Pad x only when needed (rows to bp, features to kp). No host-side dtype
    # cast: the kernel downcasts right before the first matmul.
    if bp != B or kp != n_features:
        x = jnp.pad(x, ((0, bp - B), (0, kp - n_features)))

    out_padded = pl.pallas_call(
        _mlp_kernel,
        out_shape=jax.ShapeDtypeStruct((bp, op), out_dtype),
        grid_spec=pltpu.PrefetchScalarGridSpec(
            num_scalar_prefetch=0,
            grid=grid,
            in_specs=[
                pl.BlockSpec((tm, kp), lambda i: (i, 0)),   # x tile (streamed)
                _resident_spec((kp, np_)),                  # w1
                _resident_spec((1, np_)),                   # b1
                _resident_spec((np_, np_)),                 # w2
                _resident_spec((1, np_)),                   # b2
                _resident_spec((np_, op)),                  # w3
                _resident_spec((1, op)),                    # b3
            ],
            out_specs=pl.BlockSpec((tm, op), lambda i: (i, 0)),
        ),
        compiler_params=pltpu.CompilerParams(
            dimension_semantics=("parallel",),
            vmem_limit_bytes=_pick_vmem_limit_bytes(),
        ),
    )(x, w1, b1, w2, b2, w3, b3)

    # Drop batch padding rows and the sigmoid(0)=0.5 padded output columns.
    # (n_out is static, so this is a static slice fused by XLA.)
    return out_padded[:B, :n_out]


def _reference(x, p):
    h1 = jnp.maximum(x @ p["w1"] + p["b1"], 0.0)
    h2 = jnp.maximum(h1 @ p["w2"] + p["b2"], 0.0)
    return jax.nn.sigmoid(h2 @ p["w3"] + p["b3"])


if __name__ == "__main__":
    key = jax.random.PRNGKey(0)
    k_x, k_p = jax.random.split(key)

    # Small shapes consistent with the module: batch=64, n_features=32,
    # n_neurons=64, n_out=8.
    B, n_features, n_neurons, n_out = 64, 32, 64, 8
    x = jax.random.normal(k_x, (B, n_features), dtype=jnp.float32)
    params = init_params(k_p, n_features, n_neurons, n_out)
    padded_params = prepare_params(params, compute_dtype=jnp.bfloat16)

    out = two_layer_model_forward(x, padded_params, n_out=n_out)
    out = jax.block_until_ready(out)

    ref = _reference(x, params)  # f32 reference
    assert out.shape == (B, n_out), out.shape
    # bf16 matmul inputs / bf16 inter-layer downcasts with f32 accumulation:
    # loosened tolerance (error grows with very wide hidden layers).
    assert jnp.allclose(out, ref, atol=2e-2, rtol=2e-2), (
        float(jnp.max(jnp.abs(out - ref))))
    print("KERNEL_OK")
</pallas_src>

<mosaic_0001>
module attributes {stable_mosaic.version = 11 : i64} {
  func.func @_mlp_kernel(%arg0: i32, %arg1: memref<32x128xf32, #tpu.memory_space<vmem>>, %arg2: memref<128x128xbf16, #tpu.memory_space<vmem>>, %arg3: memref<1x128xf32, #tpu.memory_space<vmem>>, %arg4: memref<128x128xbf16, #tpu.memory_space<vmem>>, %arg5: memref<1x128xf32, #tpu.memory_space<vmem>>, %arg6: memref<128x128xbf16, #tpu.memory_space<vmem>>, %arg7: memref<1x128xf32, #tpu.memory_space<vmem>>, %arg8: memref<32x128xf32, #tpu.memory_space<vmem>>) attributes {dimension_semantics = [#tpu.dimension_semantics<parallel>], iteration_bounds = array<i64: 2>, scalar_prefetch = 0 : i64, scratch_operands = 0 : i64, tpu.core_type = #tpu.core_type<tc>, window_params = [{transform_indices = @transform_0, window_bounds = array<i64: 32, 128>}, {pipeline_mode = #tpu.pipeline_mode<synchronous>, transform_indices = @transform_1, window_bounds = array<i64: 128, 128>}, {pipeline_mode = #tpu.pipeline_mode<synchronous>, transform_indices = @transform_2, window_bounds = array<i64: 1, 128>}, {pipeline_mode = #tpu.pipeline_mode<synchronous>, transform_indices = @transform_3, window_bounds = array<i64: 128, 128>}, {pipeline_mode = #tpu.pipeline_mode<synchronous>, transform_indices = @transform_4, window_bounds = array<i64: 1, 128>}, {pipeline_mode = #tpu.pipeline_mode<synchronous>, transform_indices = @transform_5, window_bounds = array<i64: 128, 128>}, {pipeline_mode = #tpu.pipeline_mode<synchronous>, transform_indices = @transform_6, window_bounds = array<i64: 1, 128>}, {transform_indices = @transform_7, window_bounds = array<i64: 32, 128>}]} {
    %c0 = arith.constant 0 : index
    %c0_0 = arith.constant 0 : index
    %0 = vector.load %arg1[%c0, %c0_0] : memref<32x128xf32, #tpu.memory_space<vmem>>, vector<32x128xf32>
    %1 = arith.truncf %0 : vector<32x128xf32> to vector<32x128xbf16>
    %c0_1 = arith.constant 0 : index
    %c0_2 = arith.constant 0 : index
    %2 = vector.load %arg2[%c0_1, %c0_2] : memref<128x128xbf16, #tpu.memory_space<vmem>>, vector<128x128xbf16>
    %cst = arith.constant dense<0.000000e+00> : vector<32x128xf32>
    %3 = tpu.matmul %1, %2, %cst {dimension_numbers = #tpu.dot_dimension_numbers<[1], [0], [0], [1], [0, 0, 1, 1], [], []>} : vector<32x128xbf16>, vector<128x128xbf16>, vector<32x128xf32> -> vector<32x128xf32>
    %c0_3 = arith.constant 0 : index
    %c0_4 = arith.constant 0 : index
    %4 = vector.load %arg3[%c0_3, %c0_4] : memref<1x128xf32, #tpu.memory_space<vmem>>, vector<1x128xf32>
    %5 = vector.broadcast %4 : vector<1x128xf32> to vector<32x128xf32>
    %6 = arith.addf %3, %5 : vector<32x128xf32>
    %cst_5 = arith.constant 0.000000e+00 : f32
    %7 = vector.broadcast %cst_5 : f32 to vector<32x128xf32>
    %8 = arith.maximumf %6, %7 : vector<32x128xf32>
    %9 = arith.truncf %8 : vector<32x128xf32> to vector<32x128xbf16>
    %c0_6 = arith.constant 0 : index
    %c0_7 = arith.constant 0 : index
    %10 = vector.load %arg4[%c0_6, %c0_7] : memref<128x128xbf16, #tpu.memory_space<vmem>>, vector<128x128xbf16>
    %cst_8 = arith.constant dense<0.000000e+00> : vector<32x128xf32>
    %11 = tpu.matmul %9, %10, %cst_8 {dimension_numbers = #tpu.dot_dimension_numbers<[1], [0], [0], [1], [0, 0, 1, 1], [], []>} : vector<32x128xbf16>, vector<128x128xbf16>, vector<32x128xf32> -> vector<32x128xf32>
    %c0_9 = arith.constant 0 : index
    %c0_10 = arith.constant 0 : index
    %12 = vector.load %arg5[%c0_9, %c0_10] : memref<1x128xf32, #tpu.memory_space<vmem>>, vector<1x128xf32>
    %13 = vector.broadcast %12 : vector<1x128xf32> to vector<32x128xf32>
    %14 = arith.addf %11, %13 : vector<32x128xf32>
    %cst_11 = arith.constant 0.000000e+00 : f32
    %15 = vector.broadcast %cst_11 : f32 to vector<32x128xf32>
    %16 = arith.maximumf %14, %15 : vector<32x128xf32>
    %17 = arith.truncf %16 : vector<32x128xf32> to vector<32x128xbf16>
    %c0_12 = arith.constant 0 : index
    %c0_13 = arith.constant 0 : index
    %18 = vector.load %arg6[%c0_12, %c0_13] : memref<128x128xbf16, #tpu.memory_space<vmem>>, vector<128x128xbf16>
    %cst_14 = arith.constant dense<0.000000e+00> : vector<32x128xf32>
    %19 = tpu.matmul %17, %18, %cst_14 {dimension_numbers = #tpu.dot_dimension_numbers<[1], [0], [0], [1], [0, 0, 1, 1], [], []>} : vector<32x128xbf16>, vector<128x128xbf16>, vector<32x128xf32> -> vector<32x128xf32>
    %c0_15 = arith.constant 0 : index
    %c0_16 = arith.constant 0 : index
    %20 = vector.load %arg7[%c0_15, %c0_16] : memref<1x128xf32, #tpu.memory_space<vmem>>, vector<1x128xf32>
    %21 = vector.broadcast %20 : vector<1x128xf32> to vector<32x128xf32>
    %22 = arith.addf %19, %21 : vector<32x128xf32>
    %cst_17 = arith.constant 0.000000e+00 : f32
    %23 = vector.broadcast %cst_17 : f32 to vector<32x128xf32>
    %24 = arith.subf %23, %22 : vector<32x128xf32>
    %25 = math.exp %24 : vector<32x128xf32>
    %cst_18 = arith.constant 1.000000e+00 : f32
    %26 = vector.broadcast %cst_18 : f32 to vector<32x128xf32>
    %27 = arith.addf %26, %25 : vector<32x128xf32>
    %28 = tpu.reciprocal %27 {approx = true} : vector<32x128xf32> -> vector<32x128xf32>
    %c0_19 = arith.constant 0 : index
    %c0_20 = arith.constant 0 : index
    %29 = vector.load %arg8[%c0_19, %c0_20] : memref<32x128xf32, #tpu.memory_space<vmem>>, vector<32x128xf32>
    tpu.vector_store %arg8[%c0_19, %c0_20], %28 {strides = array<i32>} : memref<32x128xf32, #tpu.memory_space<vmem>>, vector<32x128xf32>,
    return
  }
  func.func @transform_0(%arg0: i32) -> (i32, i32) {
    %c0_i32 = arith.constant 0 : i32
    %c0_i32_0 = arith.constant 0 : i32
    return %arg0, %c0_i32 : i32, i32
  }
  func.func @transform_1(%arg0: i32) -> (i32, i32) {
    %c0_i32 = arith.constant 0 : i32
    %c0_i32_0 = arith.constant 0 : i32
    %c0_i32_1 = arith.constant 0 : i32
    return %c0_i32, %c0_i32_0 : i32, i32
  }
  func.func @transform_2(%arg0: i32) -> (i32, i32) {
    %c0_i32 = arith.constant 0 : i32
    %c0_i32_0 = arith.constant 0 : i32
    %c0_i32_1 = arith.constant 0 : i32
    return %c0_i32, %c0_i32_0 : i32, i32
  }
  func.func @transform_3(%arg0: i32) -> (i32, i32) {
    %c0_i32 = arith.constant 0 : i32
    %c0_i32_0 = arith.constant 0 : i32
    %c0_i32_1 = arith.constant 0 : i32
    return %c0_i32, %c0_i32_0 : i32, i32
  }
  func.func @transform_4(%arg0: i32) -> (i32, i32) {
    %c0_i32 = arith.constant 0 : i32
    %c0_i32_0 = arith.constant 0 : i32
    %c0_i32_1 = arith.constant 0 : i32
    return %c0_i32, %c0_i32_0 : i32, i32
  }
  func.func @transform_5(%arg0: i32) -> (i32, i32) {
    %c0_i32 = arith.constant 0 : i32
    %c0_i32_0 = arith.constant 0 : i32
    %c0_i32_1 = arith.constant 0 : i32
    return %c0_i32, %c0_i32_0 : i32, i32
  }
  func.func @transform_6(%arg0: i32) -> (i32, i32) {
    %c0_i32 = arith.constant 0 : i32
    %c0_i32_0 = arith.constant 0 : i32
    %c0_i32_1 = arith.constant 0 : i32
    return %c0_i32, %c0_i32_0 : i32, i32
  }
  func.func @transform_7(%arg0: i32) -> (i32, i32) {
    %c0_i32 = arith.constant 0 : i32
    %c0_i32_0 = arith.constant 0 : i32
    return %arg0, %c0_i32 : i32, i32
  }
}

</mosaic_0001>

<llo_original>
// kernel: two_layer_model_forward.1
$region0: #{two_layer_model_forward.1}
  #allocation0 [shape = 'u32[]', space=smem, size = 0x4, offset = 0x4, fixed_abs, tag = 'smem constant byte address 0x4 - core index']
  #allocation1 [shape = 'u32[144,128]{1,0:T(1,128)}', space=vmem, size = 0x12000, scoped, tag = 'internal scratch']
  %s0 = inlined_call_operand.vmem [shape: f32[64,128], index: 0, kind: input, shape index: {}]
  %s1 = inlined_call_operand.vmem [shape: bf16[128,128], index: 1, kind: input, shape index: {}]
  %s2 = inlined_call_operand.vmem [shape: f32[1,128], index: 2, kind: input, shape index: {}]
  %s3 = inlined_call_operand.vmem [shape: bf16[128,128], index: 3, kind: input, shape index: {}]
  %s4 = inlined_call_operand.vmem [shape: f32[1,128], index: 4, kind: input, shape index: {}]
  %s5 = inlined_call_operand.vmem [shape: bf16[128,128], index: 5, kind: input, shape index: {}]
  %s6 = inlined_call_operand.vmem [shape: f32[1,128], index: 6, kind: input, shape index: {}]
  %s7 = inlined_call_operand.vmem [shape: f32[64,128], index: 7, kind: output, shape index: {}]
  %s8 = sld [smem:[#allocation0]]
  $region61: #{two_layer_model_forward.1} parent=0
    _
  %s10 = ssub.s32 1, %s8
  %s11 = scalar_select 0, %s10, %s8
  loop: start=0, step=1, limit=4
  $region2: #{two_layer_model_forward.1} parent=0 // loop_pre_header
    _
  $region3: #{two_layer_model_forward.1} parent=0 // loop_header
    %s13 = sphi 0, %s17
    %p14 = scmp.ge.s32.totalorder %s13, 4
    %s23 = sphi 0, %s25
    %s26 = sphi 0, %s23
    %s27 = sphi 0, %s26
    %s43 = sphi 0, %s27
    %s47 = sphi 0, %s47
    %s49 = sphi 0, %s47
    %s50 = sphi 0, %s49
    %s64 = sphi 0, %s50
    %s68 = sphi 0, %s68
    %s70 = sphi 0, %s68
    %s71 = sphi 0, %s70
    %s85 = sphi 0, %s71
    %s89 = sphi 0, %s89
    %s91 = sphi 0, %s89
    %s92 = sphi 0, %s91
    %s106 = sphi 0, %s92
    %s110 = sphi 0, %s110
    %s112 = sphi 0, %s110
    %s113 = sphi 0, %s112
    %s127 = sphi 0, %s113
    %s131 = sphi 0, %s131
    %s133 = sphi 0, %s131
    %s134 = sphi 0, %s133
    %s148 = sphi 0, %s134
    %s152 = sphi 0, %s152
    %s154 = sphi 0, %s152
    %s155 = sphi 0, %s154
    %s169 = sphi 0, %s155
    %s175 = sphi 0, %s177
    %s178 = sphi 0, %s175
    %s179 = sphi 0, %s178
    %s195 = sphi 0, %s179
  $region4: #{two_layer_model_forward.1} parent=0 // loop_header_branch
    %16 = sbr.rel (%p14) target = $region8
  $region5: #{two_layer_model_forward.1} parent=0 // loop_body
    %s18 = ssub.s32 %s13, 1
    %s19 = ssub.s32 %s13, 2
    %s20 = sadd.s32 %s13, 1
    %s21 = ssub.s32 %s13, %s20
    %p22 = scmp.eq.s32.totalorder %s21, 0
    %s24 = sadd.s32 %s23, 1
    %s25 = scalar_select %p22, %s23, %s24
    %p28 = pneg %p22
    %p29 = scmp.eq.s32.totalorder %s13, 1
    %p30 = por %p28, %p29
    %p31 = scmp.ne.s32.totalorder %s23, %s26
    %p32 = scmp.eq.s32.totalorder %s13, 0
    %p33 = por %p31, %p32
    %p34 = scmp.ne.s32.totalorder %s23, %s26
    %p35 = scmp.eq.s32.totalorder %s18, 1
    %p36 = por %p34, %p35
    %p37 = scmp.ne.s32.totalorder %s26, %s27
    %p38 = scmp.eq.s32.totalorder %s18, 0
    %p39 = por %p37, %p38
    %p40 = scmp.ne.s32.totalorder %s26, %s27
    %p41 = scmp.eq.s32.totalorder %s19, 1
    %p42 = por %p40, %p41
    %p44 = scmp.ne.s32.totalorder %s27, %s43
    %p45 = scmp.eq.s32.totalorder %s19, 0
    %p46 = por %p44, %p45
    %s48 = sadd.s32 %s47, 1
    %p51 = scmp.eq.s32.totalorder %s13, 1
    %p52 = scmp.ne.s32.totalorder %s47, %s49
    %p53 = scmp.eq.s32.totalorder %s13, 0
    %p54 = por %p52, %p53
    %p55 = scmp.ne.s32.totalorder %s47, %s49
    %p56 = scmp.eq.s32.totalorder %s18, 1
    %p57 = por %p55, %p56
    %p58 = scmp.ne.s32.totalorder %s49, %s50
    %p59 = scmp.eq.s32.totalorder %s18, 0
    %p60 = por %p58, %p59
    %p61 = scmp.ne.s32.totalorder %s49, %s50
    %p62 = scmp.eq.s32.totalorder %s19, 1
    %p63 = por %p61, %p62
    %p65 = scmp.ne.s32.totalorder %s50, %s64
    %p66 = scmp.eq.s32.totalorder %s19, 0
    %p67 = por %p65, %p66
    %s69 = sadd.s32 %s68, 1
    %p72 = scmp.eq.s32.totalorder %s13, 1
    %p73 = scmp.ne.s32.totalorder %s68, %s70
    %p74 = scmp.eq.s32.totalorder %s13, 0
    %p75 = por %p73, %p74
    %p76 = scmp.ne.s32.totalorder %s68, %s70
    %p77 = scmp.eq.s32.totalorder %s18, 1
    %p78 = por %p76, %p77
    %p79 = scmp.ne.s32.totalorder %s70, %s71
    %p80 = scmp.eq.s32.totalorder %s18, 0
    %p81 = por %p79, %p80
    %p82 = scmp.ne.s32.totalorder %s70, %s71
    %p83 = scmp.eq.s32.totalorder %s19, 1
    %p84 = por %p82, %p83
    %p86 = scmp.ne.s32.totalorder %s71, %s85
    %p87 = scmp.eq.s32.totalorder %s19, 0
    %p88 = por %p86, %p87
    %s90 = sadd.s32 %s89, 1
    %p93 = scmp.eq.s32.totalorder %s13, 1
    %p94 = scmp.ne.s32.totalorder %s89, %s91
    %p95 = scmp.eq.s32.totalorder %s13, 0
    %p96 = por %p94, %p95
    %p97 = scmp.ne.s32.totalorder %s89, %s91
    %p98 = scmp.eq.s32.totalorder %s18, 1
    %p99 = por %p97, %p98
    %p100 = scmp.ne.s32.totalorder %s91, %s92
    %p101 = scmp.eq.s32.totalorder %s18, 0
    %p102 = por %p100, %p101
    %p103 = scmp.ne.s32.totalorder %s91, %s92
    %p104 = scmp.eq.s32.totalorder %s19, 1
    %p105 = por %p103, %p104
    %p107 = scmp.ne.s32.totalorder %s92, %s106
    %p108 = scmp.eq.s32.totalorder %s19, 0
    %p109 = por %p107, %p108
    %s111 = sadd.s32 %s110, 1
    %p114 = scmp.eq.s32.totalorder %s13, 1
    %p115 = scmp.ne.s32.totalorder %s110, %s112
    %p116 = scmp.eq.s32.totalorder %s13, 0
    %p117 = por %p115, %p116
    %p118 = scmp.ne.s32.totalorder %s110, %s112
    %p119 = scmp.eq.s32.totalorder %s18, 1
    %p120 = por %p118, %p119
    %p121 = scmp.ne.s32.totalorder %s112, %s113
    %p122 = scmp.eq.s32.totalorder %s18, 0
    %p123 = por %p121, %p122
    %p124 = scmp.ne.s32.totalorder %s112, %s113
    %p125 = scmp.eq.s32.totalorder %s19, 1
    %p126 = por %p124, %p125
    %p128 = scmp.ne.s32.totalorder %s113, %s127
    %p129 = scmp.eq.s32.totalorder %s19, 0
    %p130 = por %p128, %p129
    %s132 = sadd.s32 %s131, 1
    %p135 = scmp.eq.s32.totalorder %s13, 1
    %p136 = scmp.ne.s32.totalorder %s131, %s133
    %p137 = scmp.eq.s32.totalorder %s13, 0
    %p138 = por %p136, %p137
    %p139 = scmp.ne.s32.totalorder %s131, %s133
    %p140 = scmp.eq.s32.totalorder %s18, 1
    %p141 = por %p139, %p140
    %p142 = scmp.ne.s32.totalorder %s133, %s134
    %p143 = scmp.eq.s32.totalorder %s18, 0
    %p144 = por %p142, %p143
    %p145 = scmp.ne.s32.totalorder %s133, %s134
    %p146 = scmp.eq.s32.totalorder %s19, 1
    %p147 = por %p145, %p146
    %p149 = scmp.ne.s32.totalorder %s134, %s148
    %p150 = scmp.eq.s32.totalorder %s19, 0
    %p151 = por %p149, %p150
    %s153 = sadd.s32 %s152, 1
    %p156 = scmp.eq.s32.totalorder %s13, 1
    %p157 = scmp.ne.s32.totalorder %s152, %s154
    %p158 = scmp.eq.s32.totalorder %s13, 0
    %p159 = por %p157, %p158
    %p160 = scmp.ne.s32.totalorder %s152, %s154
    %p161 = scmp.eq.s32.totalorder %s18, 1
    %p162 = por %p160, %p161
    %p163 = scmp.ne.s32.totalorder %s154, %s155
    %p164 = scmp.eq.s32.totalorder %s18, 0
    %p165 = por %p163, %p164
    %p166 = scmp.ne.s32.totalorder %s154, %s155
    %p167 = scmp.eq.s32.totalorder %s19, 1
    %p168 = por %p166, %p167
    %p170 = scmp.ne.s32.totalorder %s155, %s169
    %p171 = scmp.eq.s32.totalorder %s19, 0
    %p172 = por %p170, %p171
    %s173 = ssub.s32 %s13, %s20
    %p174 = scmp.eq.s32.totalorder %s173, 0
    %s176 = sadd.s32 %s175, 1
    %s177 = scalar_select %p174, %s175, %s176
    %p180 = pneg %p174
    %p181 = scmp.eq.s32.totalorder %s13, 1
    %p182 = por %p180, %p181
    %p183 = scmp.ne.s32.totalorder %s175, %s178
    %p184 = scmp.eq.s32.totalorder %s13, 0
    %p185 = por %p183, %p184
    %p186 = scmp.ne.s32.totalorder %s175, %s178
    %p187 = scmp.eq.s32.totalorder %s18, 1
    %p188 = por %p186, %p187
    %p189 = scmp.ne.s32.totalorder %s178, %s179
    %p190 = scmp.eq.s32.totalorder %s18, 0
    %p191 = por %p189, %p190
    %p192 = scmp.ne.s32.totalorder %s178, %s179
    %p193 = scmp.eq.s32.totalorder %s19, 1
    %p194 = por %p192, %p193
    %p196 = scmp.ne.s32.totalorder %s179, %s195
    %p197 = scmp.eq.s32.totalorder %s19, 0
    %p198 = por %p196, %p197
    %p199 = scmp.le.s32.totalorder 1, %s13
    %p200 = scmp.lt.s32.totalorder %s13, 3
    %p201 = pnand %p199, %p200
    %p202 = pneg %p201
    // Predicated region
    $region9: #{two_layer_model_forward.1} parent=5 // pred_check
      _
    $region10: #{two_layer_model_forward.1} parent=5 // pred_check_branch
      %204 = sbr.rel (%p201) target = $region12
    $region11: #{two_layer_model_forward.1} parent=5 // pred_region
      %s205 = ssub.s32 %s13, 1
      // Predicated region
      $region13: #{two_layer_model_forward.1} parent=11 // pred_check
        %p206 = pneg %p60
      $region14: #{two_layer_model_forward.1} parent=11 // pred_check_branch
        %208 = sbr.rel (%p206) target = $region16
      $region15: #{two_layer_model_forward.1} parent=11 // pred_region
        _
      $region16: #{two_layer_model_forward.1} parent=11 // pred_fallthru
        _
      // Predicated region
      $region17: #{two_layer_model_forward.1} parent=11 // pred_check
        %p209 = pneg %p81
      $region18: #{two_layer_model_forward.1} parent=11 // pred_check_branch
        %211 = sbr.rel (%p209) target = $region20
      $region19: #{two_layer_model_forward.1} parent=11 // pred_region
        _
      $region20: #{two_layer_model_forward.1} parent=11 // pred_fallthru
        _
      // Predicated region
      $region21: #{two_layer_model_forward.1} parent=11 // pred_check
        %p212 = pneg %p102
      $region22: #{two_layer_model_forward.1} parent=11 // pred_check_branch
        %214 = sbr.rel (%p212) target = $region24
      $region23: #{two_layer_model_forward.1} parent=11 // pred_region
        _
      $region24: #{two_layer_model_forward.1} parent=11 // pred_fallthru
        _
      // Predicated region
      $region25: #{two_layer_model_forward.1} parent=11 // pred_check
        %p215 = pneg %p123
      $region26: #{two_layer_model_forward.1} parent=11 // pred_check_branch
        %217 = sbr.rel (%p215) target = $region28
      $region27: #{two_layer_model_forward.1} parent=11 // pred_region
        _
      $region28: #{two_layer_model_forward.1} parent=11 // pred_fallthru
        _
      // Predicated region
      $region29: #{two_layer_model_forward.1} parent=11 // pred_check
        %p218 = pneg %p144
      $region30: #{two_layer_model_forward.1} parent=11 // pred_check_branch
        %220 = sbr.rel (%p218) target = $region32
      $region31: #{two_layer_model_forward.1} parent=11 // pred_region
        _
      $region32: #{two_layer_model_forward.1} parent=11 // pred_fallthru
        _
      // Predicated region
      $region33: #{two_layer_model_forward.1} parent=11 // pred_check
        %p221 = pneg %p165
      $region34: #{two_layer_model_forward.1} parent=11 // pred_check_branch
        %223 = sbr.rel (%p221) target = $region36
      $region35: #{two_layer_model_forward.1} parent=11 // pred_region
        _
      $region36: #{two_layer_model_forward.1} parent=11 // pred_fallthru
        _
    $region12: #{two_layer_model_forward.1} parent=5 // pred_fallthru
      _
    %p224 = scmp.lt.s32.totalorder %s13, 2
    // Predicated region
    $region37: #{two_layer_model_forward.1} parent=5 // pred_check
      %p225 = pneg %p224
    $region38: #{two_layer_model_forward.1} parent=5 // pred_check_branch
      %227 = sbr.rel (%p225) target = $region40
    $region39: #{two_layer_model_forward.1} parent=5 // pred_region
      // Predicated region
      $region41: #{two_layer_model_forward.1} parent=39 // pred_check
        %p228 = pneg %p33
      $region42: #{two_layer_model_forward.1} parent=39 // pred_check_branch
        %230 = sbr.rel (%p228) target = $region44
      $region43: #{two_layer_model_forward.1} parent=39 // pred_region
        %s231 = smul.u32 4, %s13
        %p232 = scmp.lt.s32.totalorder %s231, 7
        %s233 = scalar_select %p232, %s231, 7
        %s234 = smul.addr %s233, 8
        %s235 = scalar_lea.vmem %s0, %s234
        %s236 = smul.u32 4, %s13
      $region44: #{two_layer_model_forward.1} parent=39 // pred_fallthru
        _
    $region40: #{two_layer_model_forward.1} parent=5 // pred_fallthru
      _
    %p237 = scmp.le.s32.totalorder 1, %s13
    %p238 = scmp.lt.s32.totalorder %s13, 3
    %p239 = pnand %p237, %p238
    %p240 = pneg %p239
    // Predicated region
    $region45: #{two_layer_model_forward.1} parent=5 // pred_check
      _
    $region46: #{two_layer_model_forward.1} parent=5 // pred_check_branch
      %242 = sbr.rel (%p239) target = $region48
    $region47: #{two_layer_model_forward.1} parent=5 // pred_region
      %s243 = ssub.s32 %s13, 1
      %s244 = smul.u32 4, %s18
      %p245 = scmp.lt.s32.totalorder %s244, 7
      %s246 = scalar_select %p245, %s244, 7
      %s247 = smul.addr %s246, 8
      %s248 = scalar_lea.vmem %s0, %s247
      %p249 = pneg %p39
      %p250 = pneg %p36
      %p251 = pneg %p60
      %p252 = pneg %p57
      %p253 = pneg %p81
      %p254 = pneg %p78
      %p255 = pneg %p102
      %p256 = pneg %p99
      %p257 = pneg %p123
      %p258 = pneg %p120
      %p259 = pneg %p144
      %p260 = pneg %p141
      %p261 = pneg %p165
      %p262 = pneg %p162
      %p263 = pneg %p191
      %p264 = pneg %p188
      %s265 = smul.u32 4, %s18
      %p266 = scmp.lt.s32.totalorder %s265, 7
      %s267 = scalar_select %p266, %s265, 7
      %s268 = smul.addr %s267, 8
      %s269 = scalar_lea.vmem %s7, %s268
      %s270 = smul.u32 4, %s18
      %p271 = scmp.lt.s32.totalorder %s270, 7
      %s272 = scalar_select %p271, %s270, 7
      %s273 = smul.addr %s272, 8
      %s274 = scalar_lea.vmem %s0, %s273
      %s275 = smul.u32 4, %s18
      %s276 = smul.u32 4, %s18
      %p277 = scmp.lt.s32.totalorder %s276, 7
      %s278 = scalar_select %p277, %s276, 7
      %s279 = smul.addr %s278, 8
      %s280 = scalar_lea.vmem %s7, %s279
      %s281 = smul.u32 4, %s18
      %v283 = vld [vmem:[%s274] sm:$0xff]
      %v284 = vld [vmem:[%s274 + $0x8] sm:$0xff]
      %v285 = vld [vmem:[%s274 + $0x10] sm:$0xff]
      %v286 = vld [vmem:[%s274 + $0x18] sm:$0xff]
      %v287 = vpack.c.bf16 %v284, %v283
      %v288 = vpack.c.bf16 %v286, %v285
      %v289 = vld [vmem:[%s1] sm:$0xf]
      %v290 = vld [vmem:[%s1 + $0x4] sm:$0xf]
      %v291 = vld [vmem:[%s1 + $0x8] sm:$0xf]
      %v292 = vld [vmem:[%s1 + $0xc] sm:$0xf]
      %v293 = vld [vmem:[%s1 + $0x10] sm:$0xf]
      %v294 = vld [vmem:[%s1 + $0x14] sm:$0xf]
      %v295 = vld [vmem:[%s1 + $0x18] sm:$0xf]
      %v296 = vld [vmem:[%s1 + $0x1c] sm:$0xf]
      %v297 = vld [vmem:[%s1 + $0x20] sm:$0xf]
      %v298 = vld [vmem:[%s1 + $0x24] sm:$0xf]
      %v299 = vld [vmem:[%s1 + $0x28] sm:$0xf]
      %v300 = vld [vmem:[%s1 + $0x2c] sm:$0xf]
      %v301 = vld [vmem:[%s1 + $0x30] sm:$0xf]
      %v302 = vld [vmem:[%s1 + $0x34] sm:$0xf]
      %v303 = vld [vmem:[%s1 + $0x38] sm:$0xf]
      %v304 = vld [vmem:[%s1 + $0x3c] sm:$0xf]
      %v305 = vld [vmem:[%s2] sm:$0x1]
      %v307 = vlaneseq
      %v308 = vshrl.u32 %v307, 7
      %v309 = vsub.s32 0, %v308
      %v310 = vrot.slane %v305, %v309
      %v328 = vunpack.c.l.b16 %v289
      %v329 = vunpack.c.l.b16 %v290
      %v330 = vunpack.c.l.b16 %v291
      %v331 = vunpack.c.l.b16 %v292
      %v332 = vunpack.c.l.b16 %v293
      %v333 = vunpack.c.l.b16 %v294
      %v334 = vunpack.c.l.b16 %v295
      %v335 = vunpack.c.l.b16 %v296
      %v336 = vunpack.c.l.b16 %v297
      %v337 = vunpack.c.l.b16 %v298
      %v338 = vunpack.c.l.b16 %v299
      %v339 = vunpack.c.l.b16 %v300
      %v340 = vunpack.c.l.b16 %v301
      %v341 = vunpack.c.l.b16 %v302
      %v342 = vunpack.c.l.b16 %v303
      %v343 = vunpack.c.l.b16 %v304
      %v344 = vpack.c.b16 %v329, %v328
      %v345 = vpack.c.b16 %v331, %v330
      %v346 = vpack.c.b16 %v333, %v332
      %v347 = vpack.c.b16 %v335, %v334
      %v348 = vpack.c.b16 %v337, %v336
      %v349 = vpack.c.b16 %v339, %v338
      %v350 = vpack.c.b16 %v341, %v340
      %v351 = vpack.c.b16 %v343, %v342
      %360 = vmatprep.subr.bf16.mxu0 0
      %361 = vmatpush1.bf16.msra.mxu0 %v351
      %362 = vmatprep.subr.bf16.mxu0 0
      %363 = vmatpush1.bf16.msra.mxu0 %v350
      %364 = vmatprep.subr.bf16.mxu0 0
      %365 = vmatpush1.bf16.msra.mxu0 %v349
      %366 = vmatprep.subr.bf16.mxu0 0
      %367 = vmatpush1.bf16.msra.mxu0 %v348
      %368 = vmatprep.subr.bf16.mxu0 0
      %369 = vmatpush1.bf16.msra.mxu0 %v347
      %370 = vmatprep.subr.bf16.mxu0 0
      %371 = vmatpush1.bf16.msra.mxu0 %v346
      %372 = vmatprep.subr.bf16.mxu0 0
      %373 = vmatpush1.bf16.msra.mxu0 %v345
      %374 = vmatprep.subr.bf16.mxu0 0
      %375 = vmatpush1.bf16.msra.mxu0 %v344
      %376 = vmatprep.subr.bf16.mxu0 0
      %377 = vmatpush2.bf16.msra.mxu0 0
      %378 = vmatprep.subr.bf16.mxu0 0
      %379 = vmatpush2.bf16.msra.mxu0 0
      %380 = vmatprep.subr.bf16.mxu0 0
      %381 = vmatpush2.bf16.msra.mxu0 0
      %382 = vmatprep.subr.bf16.mxu0 0
      %383 = vmatpush2.bf16.msra.mxu0 0
      %384 = vmatprep.subr.bf16.mxu0 0
      %385 = vmatpush2.bf16.msra.mxu0 0
      %386 = vmatprep.subr.bf16.mxu0 0
      %387 = vmatpush2.bf16.msra.mxu0 0
      %388 = vmatprep.subr.bf16.mxu0 0
      %389 = vmatpush2.bf16.msra.mxu0 0
      %390 = vmatprep.subr.bf16.mxu0 0
      %391 = vmatpush2.bf16.msra.mxu0 0
      %392 = vmatprep.mubr.bf16.mxu0 0
      %393 = vmatmul.mubr.bf16.gmra.mxu0 %v287
      %v394 = vpop.f32.mrf.mxu0
      %v395 = vadd.f32 %v310, %v394
      %v396 = vpop.f32.mrf.mxu0
      %v397 = vpop.f32.mrf.mxu0
      %v398 = vadd.f32 %v310, %v397
      %v399 = vpop.f32.mrf.mxu0
      %400 = vmatprep.mubr.bf16.mxu0 0
      %401 = vmatmul.mubr.bf16.gmra.mxu0 %v288
      %v402 = vpop.f32.mrf.mxu0
      %v403 = vadd.f32 %v310, %v402
      %v404 = vpop.f32.mrf.mxu0
      %v405 = vpop.f32.mrf.mxu0
      %v406 = vadd.f32 %v310, %v405
      %v407 = vpop.f32.mrf.mxu0
      %408 = vdwg.mxu0
      %v409 = vmax.f32 %v395, 0.0
      %v410 = vmax.f32 %v398, 0.0
      %v411 = vmax.f32 %v403, 0.0
      %v412 = vmax.f32 %v406, 0.0
      %v413 = vpack.c.bf16 %v410, %v409
      %v414 = vpack.c.bf16 %v412, %v411
      %v415 = vld [vmem:[%s3] sm:$0xf]
      %v416 = vld [vmem:[%s3 + $0x4] sm:$0xf]
      %v417 = vld [vmem:[%s3 + $0x8] sm:$0xf]
      %v418 = vld [vmem:[%s3 + $0xc] sm:$0xf]
      %v419 = vld [vmem:[%s3 + $0x10] sm:$0xf]
      %v420 = vld [vmem:[%s3 + $0x14] sm:$0xf]
      %v421 = vld [vmem:[%s3 + $0x18] sm:$0xf]
      %v422 = vld [vmem:[%s3 + $0x1c] sm:$0xf]
      %v423 = vld [vmem:[%s3 + $0x20] sm:$0xf]
      %v424 = vld [vmem:[%s3 + $0x24] sm:$0xf]
      %v425 = vld [vmem:[%s3 + $0x28] sm:$0xf]
      %v426 = vld [vmem:[%s3 + $0x2c] sm:$0xf]
      %v427 = vld [vmem:[%s3 + $0x30] sm:$0xf]
      %v428 = vld [vmem:[%s3 + $0x34] sm:$0xf]
      %v429 = vld [vmem:[%s3 + $0x38] sm:$0xf]
      %v430 = vld [vmem:[%s3 + $0x3c] sm:$0xf]
      %v431 = vld [vmem:[%s4] sm:$0x1]
      %v433 = vlaneseq
      %v434 = vshrl.u32 %v433, 7
      %v435 = vsub.s32 0, %v434
      %v436 = vrot.slane %v431, %v435
      %v454 = vunpack.c.l.b16 %v415
      %v455 = vunpack.c.l.b16 %v416
      %v456 = vunpack.c.l.b16 %v417
      %v457 = vunpack.c.l.b16 %v418
      %v458 = vunpack.c.l.b16 %v419
      %v459 = vunpack.c.l.b16 %v420
      %v460 = vunpack.c.l.b16 %v421
      %v461 = vunpack.c.l.b16 %v422
      %v462 = vunpack.c.l.b16 %v423
      %v463 = vunpack.c.l.b16 %v424
      %v464 = vunpack.c.l.b16 %v425
      %v465 = vunpack.c.l.b16 %v426
      %v466 = vunpack.c.l.b16 %v427
      %v467 = vunpack.c.l.b16 %v428
      %v468 = vunpack.c.l.b16 %v429
      %v469 = vunpack.c.l.b16 %v430
      %v470 = vpack.c.b16 %v455, %v454
      %v471 = vpack.c.b16 %v457, %v456
      %v472 = vpack.c.b16 %v459, %v458
      %v473 = vpack.c.b16 %v461, %v460
      %v474 = vpack.c.b16 %v463, %v462
      %v475 = vpack.c.b16 %v465, %v464
      %v476 = vpack.c.b16 %v467, %v466
      %v477 = vpack.c.b16 %v469, %v468
      %486 = vmatprep.subr.bf16.mxu0 0
      %487 = vmatpush1.bf16.msra.mxu0 %v477
      %488 = vmatprep.subr.bf16.mxu0 0
      %489 = vmatpush1.bf16.msra.mxu0 %v476
      %490 = vmatprep.subr.bf16.mxu0 0
      %491 = vmatpush1.bf16.msra.mxu0 %v475
      %492 = vmatprep.subr.bf16.mxu0 0
      %493 = vmatpush1.bf16.msra.mxu0 %v474
      %494 = vmatprep.subr.bf16.mxu0 0
      %495 = vmatpush1.bf16.msra.mxu0 %v473
      %496 = vmatprep.subr.bf16.mxu0 0
      %497 = vmatpush1.bf16.msra.mxu0 %v472
      %498 = vmatprep.subr.bf16.mxu0 0
      %499 = vmatpush1.bf16.msra.mxu0 %v471
      %500 = vmatprep.subr.bf16.mxu0 0
      %501 = vmatpush1.bf16.msra.mxu0 %v470
      %502 = vmatprep.subr.bf16.mxu0 0
      %503 = vmatpush2.bf16.msra.mxu0 0
      %504 = vmatprep.subr.bf16.mxu0 0
      %505 = vmatpush2.bf16.msra.mxu0 0
      %506 = vmatprep.subr.bf16.mxu0 0
      %507 = vmatpush2.bf16.msra.mxu0 0
      %508 = vmatprep.subr.bf16.mxu0 0
      %509 = vmatpush2.bf16.msra.mxu0 0
      %510 = vmatprep.subr.bf16.mxu0 0
      %511 = vmatpush2.bf16.msra.mxu0 0
      %512 = vmatprep.subr.bf16.mxu0 0
      %513 = vmatpush2.bf16.msra.mxu0 0
      %514 = vmatprep.subr.bf16.mxu0 0
      %515 = vmatpush2.bf16.msra.mxu0 0
      %516 = vmatprep.subr.bf16.mxu0 0
      %517 = vmatpush2.bf16.msra.mxu0 0
      %518 = vmatprep.mubr.bf16.mxu0 0
      %519 = vmatmul.mubr.bf16.gmra.mxu0 %v413
      %v520 = vpop.f32.mrf.mxu0
      %v521 = vadd.f32 %v436, %v520
      %v522 = vpop.f32.mrf.mxu0
      %v523 = vpop.f32.mrf.mxu0
      %v524 = vadd.f32 %v436, %v523
      %v525 = vpop.f32.mrf.mxu0
      %526 = vmatprep.mubr.bf16.mxu0 0
      %527 = vmatmul.mubr.bf16.gmra.mxu0 %v414
      %v528 = vpop.f32.mrf.mxu0
      %v529 = vadd.f32 %v436, %v528
      %v530 = vpop.f32.mrf.mxu0
      %v531 = vpop.f32.mrf.mxu0
      %v532 = vadd.f32 %v436, %v531
      %v533 = vpop.f32.mrf.mxu0
      %534 = vdwg.mxu0
      %v535 = vmax.f32 %v521, 0.0
      %v536 = vmax.f32 %v524, 0.0
      %v537 = vmax.f32 %v529, 0.0
      %v538 = vmax.f32 %v532, 0.0
      %v539 = vpack.c.bf16 %v536, %v535
      %v540 = vpack.c.bf16 %v538, %v537
      %v541 = vld [vmem:[%s5] sm:$0xf]
      %v542 = vld [vmem:[%s5 + $0x4] sm:$0xf]
      %v543 = vld [vmem:[%s5 + $0x8] sm:$0xf]
      %v544 = vld [vmem:[%s5 + $0xc] sm:$0xf]
      %v545 = vld [vmem:[%s5 + $0x10] sm:$0xf]
      %v546 = vld [vmem:[%s5 + $0x14] sm:$0xf]
      %v547 = vld [vmem:[%s5 + $0x18] sm:$0xf]
      %v548 = vld [vmem:[%s5 + $0x1c] sm:$0xf]
      %v549 = vld [vmem:[%s5 + $0x20] sm:$0xf]
      %v550 = vld [vmem:[%s5 + $0x24] sm:$0xf]
      %v551 = vld [vmem:[%s5 + $0x28] sm:$0xf]
      %v552 = vld [vmem:[%s5 + $0x2c] sm:$0xf]
      %v553 = vld [vmem:[%s5 + $0x30] sm:$0xf]
      %v554 = vld [vmem:[%s5 + $0x34] sm:$0xf]
      %v555 = vld [vmem:[%s5 + $0x38] sm:$0xf]
      %v556 = vld [vmem:[%s5 + $0x3c] sm:$0xf]
      %v557 = vld [vmem:[%s6] sm:$0x1]
      %v559 = vlaneseq
      %v560 = vshrl.u32 %v559, 7
      %v561 = vsub.s32 0, %v560
      %v562 = vrot.slane %v557, %v561
      %v580 = vunpack.c.l.b16 %v541
      %v581 = vunpack.c.l.b16 %v542
      %v582 = vunpack.c.l.b16 %v543
      %v583 = vunpack.c.l.b16 %v544
      %v584 = vunpack.c.l.b16 %v545
      %v585 = vunpack.c.l.b16 %v546
      %v586 = vunpack.c.l.b16 %v547
      %v587 = vunpack.c.l.b16 %v548
      %v588 = vunpack.c.l.b16 %v549
      %v589 = vunpack.c.l.b16 %v550
      %v590 = vunpack.c.l.b16 %v551
      %v591 = vunpack.c.l.b16 %v552
      %v592 = vunpack.c.l.b16 %v553
      %v593 = vunpack.c.l.b16 %v554
      %v594 = vunpack.c.l.b16 %v555
      %v595 = vunpack.c.l.b16 %v556
      %v596 = vpack.c.b16 %v581, %v580
      %v597 = vpack.c.b16 %v583, %v582
      %v598 = vpack.c.b16 %v585, %v584
      %v599 = vpack.c.b16 %v587, %v586
      %v600 = vpack.c.b16 %v589, %v588
      %v601 = vpack.c.b16 %v591, %v590
      %v602 = vpack.c.b16 %v593, %v592
      %v603 = vpack.c.b16 %v595, %v594
      %612 = vmatprep.subr.bf16.mxu0 0
      %613 = vmatpush1.bf16.msra.mxu0 %v603
      %614 = vmatprep.subr.bf16.mxu0 0
      %615 = vmatpush1.bf16.msra.mxu0 %v602
      %616 = vmatprep.subr.bf16.mxu0 0
      %617 = vmatpush1.bf16.msra.mxu0 %v601
      %618 = vmatprep.subr.bf16.mxu0 0
      %619 = vmatpush1.bf16.msra.mxu0 %v600
      %620 = vmatprep.subr.bf16.mxu0 0
      %621 = vmatpush1.bf16.msra.mxu0 %v599
      %622 = vmatprep.subr.bf16.mxu0 0
      %623 = vmatpush1.bf16.msra.mxu0 %v598
      %624 = vmatprep.subr.bf16.mxu0 0
      %625 = vmatpush1.bf16.msra.mxu0 %v597
      %626 = vmatprep.subr.bf16.mxu0 0
      %627 = vmatpush1.bf16.msra.mxu0 %v596
      %628 = vmatprep.subr.bf16.mxu0 0
      %629 = vmatpush2.bf16.msra.mxu0 0
      %630 = vmatprep.subr.bf16.mxu0 0
      %631 = vmatpush2.bf16.msra.mxu0 0
      %632 = vmatprep.subr.bf16.mxu0 0
      %633 = vmatpush2.bf16.msra.mxu0 0
      %634 = vmatprep.subr.bf16.mxu0 0
      %635 = vmatpush2.bf16.msra.mxu0 0
      %636 = vmatprep.subr.bf16.mxu0 0
      %637 = vmatpush2.bf16.msra.mxu0 0
      %638 = vmatprep.subr.bf16.mxu0 0
      %639 = vmatpush2.bf16.msra.mxu0 0
      %640 = vmatprep.subr.bf16.mxu0 0
      %641 = vmatpush2.bf16.msra.mxu0 0
      %642 = vmatprep.subr.bf16.mxu0 0
      %643 = vmatpush2.bf16.msra.mxu0 0
      %644 = vmatprep.mubr.bf16.mxu0 0
      %645 = vmatmul.mubr.bf16.gmra.mxu0 %v539
      %v646 = vpop.f32.mrf.mxu0
      %v647 = vadd.f32 %v562, %v646
      %v648 = vpop.f32.mrf.mxu0
      %v649 = vpop.f32.mrf.mxu0
      %v650 = vadd.f32 %v562, %v649
      %v651 = vpop.f32.mrf.mxu0
      %652 = vmatprep.mubr.bf16.mxu0 0
      %653 = vmatmul.mubr.bf16.gmra.mxu0 %v540
      %v654 = vpop.f32.mrf.mxu0
      %v655 = vadd.f32 %v562, %v654
      %v656 = vpop.f32.mrf.mxu0
      %v657 = vpop.f32.mrf.mxu0
      %v658 = vadd.f32 %v562, %v657
      %v659 = vpop.f32.mrf.mxu0
      %660 = vdwg.mxu0
      %v661 = vsub.f32 0.0, %v647
      %v662 = vsub.f32 0.0, %v650
      %v663 = vsub.f32 0.0, %v655
      %v664 = vsub.f32 0.0, %v658
      %v665 = vmul.f32 %v661, 1.442695
      %v666 = vpow.pop %v665
      %v667 = vmul.f32 %v662, 1.442695
      %v668 = vpow.pop %v667
      %v669 = vmul.f32 %v663, 1.442695
      %v670 = vpow.pop %v669
      %v671 = vmul.f32 %v664, 1.442695
      %v672 = vpow.pop %v671
      %v673 = vadd.f32 %v666, 1.0
      %v674 = vadd.f32 %v668, 1.0
      %v675 = vadd.f32 %v670, 1.0
      %v676 = vadd.f32 %v672, 1.0
      %v677 = vrcp.pop %v673
      %v678 = vrcp.pop %v674
      %v679 = vrcp.pop %v675
      %v680 = vrcp.pop %v676
      %681 = vst [vmem:[%s280] sm:$0xff] %v677
      %682 = vst [vmem:[%s280 + $0x8] sm:$0xff] %v678
      %683 = vst [vmem:[%s280 + $0x10] sm:$0xff] %v679
      %684 = vst [vmem:[%s280 + $0x18] sm:$0xff] %v680
      %s685 = smul.u32 4, %s18
      %p686 = scmp.lt.s32.totalorder %s685, 7
      %s687 = scalar_select %p686, %s685, 7
      %s688 = smul.addr %s687, 8
      %s689 = scalar_lea.vmem %s7, %s688
      // Predicated region
      $region49: #{two_layer_model_forward.1} parent=47 // pred_check
        %p690 = pneg %p188
      $region50: #{two_layer_model_forward.1} parent=47 // pred_check_branch
        %692 = sbr.rel (%p690) target = $region52
      $region51: #{two_layer_model_forward.1} parent=47 // pred_region
        %s693 = smul.u32 4, %s18
      $region52: #{two_layer_model_forward.1} parent=47 // pred_fallthru
        _
    $region48: #{two_layer_model_forward.1} parent=5 // pred_fallthru
      _
    %p694 = scmp.le.s32.totalorder 2, %s13
    // Predicated region
    $region53: #{two_layer_model_forward.1} parent=5 // pred_check
      %p695 = pneg %p694
    $region54: #{two_layer_model_forward.1} parent=5 // pred_check_branch
      %697 = sbr.rel (%p695) target = $region56
    $region55: #{two_layer_model_forward.1} parent=5 // pred_region
      %s698 = ssub.s32 %s13, 2
      // Predicated region
      $region57: #{two_layer_model_forward.1} parent=55 // pred_check
        %p699 = pneg %p194
      $region58: #{two_layer_model_forward.1} parent=55 // pred_check_branch
        %701 = sbr.rel (%p699) target = $region60
      $region59: #{two_layer_model_forward.1} parent=55 // pred_region
        %s702 = smul.u32 4, %s19
        %p703 = scmp.lt.s32.totalorder %s702, 7
        %s704 = scalar_select %p703, %s702, 7
        %s705 = smul.addr %s704, 8
        %s706 = scalar_lea.vmem %s7, %s705
      $region60: #{two_layer_model_forward.1} parent=55 // pred_fallthru
        _
    $region56: #{two_layer_model_forward.1} parent=5 // pred_fallthru
      _
  $region6: #{two_layer_model_forward.1} parent=0 // loop_footer
    %s17 = sadd.s32 1, %s13
  $region7: #{two_layer_model_forward.1} parent=0 // loop_footer_branch
    %12 = sbr.rel target = $region3
  $region8: #{two_layer_model_forward.1} parent=0 // loop_exit
    _

</llo_original>
